<compile_context>
chip_gen: v5e
topology: v5e:2x2
jax: 0.10.0
libtpu: 0.0.40
codegen_flags: <defaults>
</compile_context>

<pallas_src>
import functools
import math

import jax
import jax.numpy as jnp
from jax.experimental import pallas as pl
from jax.experimental.pallas import tpu as pltpu

_SQRT2 = math.sqrt(2.0)
_EPS = 1e-5  # nn.LayerNorm default


# --------------------------------------------------------------------------
# Helpers
# --------------------------------------------------------------------------
def _row_tile(rows, cap=256):
    """Largest power-of-two tile (<= cap) that divides `rows`, else full rows."""
    t = cap
    while t >= 8:
        if rows % t == 0:
            return t
        t //= 2
    return rows


def _layernorm_f32(x, g, b):
    mean = jnp.mean(x, axis=-1, keepdims=True)
    xc = x - mean
    var = jnp.mean(xc * xc, axis=-1, keepdims=True)
    return xc * jax.lax.rsqrt(var + _EPS) * g + b


# --------------------------------------------------------------------------
# Kernels
# --------------------------------------------------------------------------
def _make_attn_block_kernel(heads, dim_head, scale, has_bias):
    """Fused: PreNorm + QKV + (bias scores) + softmax-attention + out-proj + residual."""
    inner = heads * dim_head

    def kernel(*refs):
        if has_bias:
            (x_ref, bias_ref, g_ref, b_ref, wqkv_ref, wo_ref, bo_ref, o_ref) = refs
        else:
            (x_ref, g_ref, b_ref, wqkv_ref, wo_ref, bo_ref, o_ref) = refs
            bias_ref = None

        x = x_ref[0].astype(jnp.float32)                       # (N, D)
        xn = _layernorm_f32(x, g_ref[...], b_ref[...])         # PreNorm (fused)

        wqkv = wqkv_ref[...]                                   # (D, 3*inner) bf16
        qkv = jnp.dot(xn.astype(jnp.bfloat16), wqkv,
                      preferred_element_type=jnp.float32)      # (N, 3*inner) f32

        if has_bias:
            # PyTorch applies to_qkv to the *raw* bias (no PreNorm).
            xb = bias_ref[0].astype(jnp.bfloat16)
            qkv_b = jnp.dot(xb, wqkv, preferred_element_type=jnp.float32)

        head_outs = []
        for hh in range(heads):                                # static unroll
            lo = hh * dim_head
            q = qkv[:, lo:lo + dim_head].astype(jnp.bfloat16)
            k = qkv[:, inner + lo:inner + lo + dim_head].astype(jnp.bfloat16)
            v = qkv[:, 2 * inner + lo:2 * inner + lo + dim_head].astype(jnp.bfloat16)
            s = jax.lax.dot_general(
                q, k, (((1,), (1,)), ((), ())),
                preferred_element_type=jnp.float32) * scale    # (N, N)
            if has_bias:
                qb = qkv_b[:, lo:lo + dim_head].astype(jnp.bfloat16)
                kb = qkv_b[:, inner + lo:inner + lo + dim_head].astype(jnp.bfloat16)
                s = s + jax.lax.dot_general(
                    qb, kb, (((1,), (1,)), ((), ())),
                    preferred_element_type=jnp.float32) * scale
            s = s - jnp.max(s, axis=-1, keepdims=True)
            p = jnp.exp(s)
            p = p * pl.reciprocal(jnp.sum(p, axis=-1, keepdims=True), approx=True)
            head_outs.append(jnp.dot(p.astype(jnp.bfloat16), v,
                                     preferred_element_type=jnp.float32))
        o_cat = jnp.concatenate(head_outs, axis=-1)            # (N, inner)
        out = jnp.dot(o_cat.astype(jnp.bfloat16), wo_ref[...],
                      preferred_element_type=jnp.float32) + bo_ref[...]
        o_ref[0] = (x + out).astype(o_ref.dtype)               # residual fused

    return kernel


def _ff_block_kernel(x_ref, g_ref, b_ref, w1_ref, b1_ref, w2_ref, b2_ref, o_ref):
    """Fused: PreNorm + Linear + exact GELU + Linear + residual."""
    x = x_ref[...].astype(jnp.float32)                         # (tr, D)
    xn = _layernorm_f32(x, g_ref[...], b_ref[...])
    h = jnp.dot(xn.astype(jnp.bfloat16), w1_ref[...],
                preferred_element_type=jnp.float32) + b1_ref[...]
    # exact (erf) GELU — matches torch.nn.GELU default
    h = 0.5 * h * (1.0 + jax.lax.erf(h / _SQRT2))
    f = jnp.dot(h.astype(jnp.bfloat16), w2_ref[...],
                preferred_element_type=jnp.float32) + b2_ref[...]
    o_ref[...] = (x + f).astype(o_ref.dtype)


def _layernorm_kernel(x_ref, g_ref, b_ref, o_ref):
    x = x_ref[...].astype(jnp.float32)
    o_ref[...] = _layernorm_f32(x, g_ref[...], b_ref[...]).astype(o_ref.dtype)


# --------------------------------------------------------------------------
# Pallas wrappers
# --------------------------------------------------------------------------
def attention_block(x3, bias3, g, b, wqkv, wo, bo, heads, dim_head, scale):
    # x3: (B, N, D) f32, bias3: optional (B, N, D), wqkv/wo: bf16, bo/g/b: f32
    B, N, D = x3.shape
    inner = heads * dim_head
    has_bias = bias3 is not None

    x_spec = pl.BlockSpec((1, N, D), lambda i: (i, 0, 0))
    vec = lambda dout: pl.BlockSpec((1, dout), lambda i: (0, 0))
    wqkv_spec = pl.BlockSpec((D, 3 * inner), lambda i: (0, 0))
    wo_spec = pl.BlockSpec((inner, D), lambda i: (0, 0))

    flops = (2 * B * N * D * 3 * inner
             + 4 * B * heads * N * N * dim_head
             + 2 * B * N * inner * D)
    if has_bias:
        flops += 2 * B * N * D * 3 * inner + 2 * B * heads * N * N * dim_head
    cost = pl.CostEstimate(
        flops=int(flops),
        transcendentals=int(B * heads * N * N),
        bytes_accessed=int(4 * (2 + has_bias) * B * N * D
                           + 2 * (D * 3 * inner + inner * D) + 4 * 3 * D),
    )

    kern = _make_attn_block_kernel(heads, dim_head, scale, has_bias)
    in_specs = [x_spec] + ([x_spec] if has_bias else []) + \
               [vec(D), vec(D), wqkv_spec, wo_spec, vec(D)]
    operands = (x3,) + ((bias3,) if has_bias else ()) + \
               (g.reshape(1, D), b.reshape(1, D), wqkv, wo, bo.reshape(1, D))
    return pl.pallas_call(
        kern,
        out_shape=jax.ShapeDtypeStruct((B, N, D), x3.dtype),
        grid=(B,),
        in_specs=in_specs,
        out_specs=x_spec,
        compiler_params=pltpu.CompilerParams(dimension_semantics=("parallel",)),
        cost_estimate=cost,
    )(*operands)


def ff_block(x2, g, b, w1, b1, w2, b2):
    # x2: (R, D) f32, w1/w2: bf16, biases/LN params: f32
    R, D = x2.shape
    Dff = w1.shape[1]
    tr = _row_tile(R)
    grid = (R // tr,)

    x_spec = pl.BlockSpec((tr, D), lambda i: (i, 0))
    cost = pl.CostEstimate(
        flops=int(4 * R * D * Dff),
        transcendentals=int(R * Dff),
        bytes_accessed=int(4 * 2 * R * D + 2 * 2 * D * Dff + 4 * (2 * D + Dff)),
    )
    return pl.pallas_call(
        _ff_block_kernel,
        out_shape=jax.ShapeDtypeStruct((R, D), x2.dtype),
        grid=grid,
        in_specs=[
            x_spec,
            pl.BlockSpec((1, D), lambda i: (0, 0)),
            pl.BlockSpec((1, D), lambda i: (0, 0)),
            pl.BlockSpec((D, Dff), lambda i: (0, 0)),
            pl.BlockSpec((1, Dff), lambda i: (0, 0)),
            pl.BlockSpec((Dff, D), lambda i: (0, 0)),
            pl.BlockSpec((1, D), lambda i: (0, 0)),
        ],
        out_specs=x_spec,
        compiler_params=pltpu.CompilerParams(dimension_semantics=("parallel",)),
        cost_estimate=cost,
    )(x2, g.reshape(1, D), b.reshape(1, D), w1, b1.reshape(1, Dff),
      w2, b2.reshape(1, D))


def final_layernorm(x2, g, b):
    R, D = x2.shape
    tr = _row_tile(R)
    x_spec = pl.BlockSpec((tr, D), lambda i: (i, 0))
    return pl.pallas_call(
        _layernorm_kernel,
        out_shape=jax.ShapeDtypeStruct((R, D), x2.dtype),
        grid=(R // tr,),
        in_specs=[x_spec,
                  pl.BlockSpec((1, D), lambda i: (0, 0)),
                  pl.BlockSpec((1, D), lambda i: (0, 0))],
        out_specs=x_spec,
        compiler_params=pltpu.CompilerParams(dimension_semantics=("parallel",)),
    )(x2, g.reshape(1, D), b.reshape(1, D))


# --------------------------------------------------------------------------
# Parameters (PyTorch-style init: uniform(-1/sqrt(fan_in)) Linear, ones/zeros LN)
# --------------------------------------------------------------------------
def init_params(key, dim, depth, heads, dim_head, mult):
    assert not (heads == 1 and dim_head == dim), "project_out path assumed"
    inner = heads * dim_head
    ff_inner = int(dim * mult)

    def linear_init(k, din, dout, bias=True):
        k1, k2 = jax.random.split(k)
        bound = 1.0 / math.sqrt(din)
        W = jax.random.uniform(k1, (din, dout), jnp.float32, -bound, bound)
        b = jax.random.uniform(k2, (dout,), jnp.float32, -bound, bound) if bias else None
        return W, b

    layers = []
    for lk in jax.random.split(key, depth):
        k_qkv, k_out, k_ff1, k_ff2 = jax.random.split(lk, 4)
        wqkv, _ = linear_init(k_qkv, dim, inner * 3, bias=False)
        wo, bo = linear_init(k_out, inner, dim)
        w1, b1 = linear_init(k_ff1, dim, ff_inner)
        w2, b2 = linear_init(k_ff2, ff_inner, dim)
        layers.append(dict(
            ln1_g=jnp.ones((dim,), jnp.float32), ln1_b=jnp.zeros((dim,), jnp.float32),
            wqkv=wqkv, wo=wo, bo=bo,
            ln2_g=jnp.ones((dim,), jnp.float32), ln2_b=jnp.zeros((dim,), jnp.float32),
            w1=w1, b1=b1, w2=w2, b2=b2,
        ))
    return dict(
        heads=heads, dim_head=dim_head, layers=layers,
        final_g=jnp.ones((dim,), jnp.float32),
        final_b=jnp.zeros((dim,), jnp.float32),
    )


# --------------------------------------------------------------------------
# Forward pass: 2 fused pallas_calls per layer + 1 final LayerNorm call
# --------------------------------------------------------------------------
def temporal_transformer_forward(params, x, bias=None):
    B, N, D = x.shape
    heads, dh = params["heads"], params["dim_head"]
    scale = dh ** -0.5
    if bias is not None:
        # Bias scores (Nb, Nb) are added to (N, N) logits -> requires Nb == N.
        assert bias.shape == (B, N, D)

    x3 = x
    for L in params["layers"]:
        # Ship weights to the MXU kernels in bf16 (f32 accumulation inside).
        wqkv = L["wqkv"].astype(jnp.bfloat16)
        wo = L["wo"].astype(jnp.bfloat16)
        w1 = L["w1"].astype(jnp.bfloat16)
        w2 = L["w2"].astype(jnp.bfloat16)

        # Fused PreNorm + TemporalAttention + residual (dropout=0 -> identity).
        x3 = attention_block(x3, bias, L["ln1_g"], L["ln1_b"],
                             wqkv, wo, L["bo"], heads, dh, scale)

        # Fused PreNorm + FeedForward + residual (free reshape, no transpose).
        x2 = ff_block(x3.reshape(B * N, D), L["ln2_g"], L["ln2_b"],
                      w1, L["b1"], w2, L["b2"])
        x3 = x2.reshape(B, N, D)

    x2 = final_layernorm(x3.reshape(B * N, D), params["final_g"], params["final_b"])
    return x2.reshape(B, N, D)


# --------------------------------------------------------------------------
# Pure-JAX reference mirroring the kernels' precision policy
# (bf16 matmul operands, f32 accumulation, f32 LN/softmax/GELU).
# --------------------------------------------------------------------------
def ref_forward(params, x, bias=None):
    heads, dh = params["heads"], params["dim_head"]
    scale = dh ** -0.5
    B, N, D = x.shape
    bf16 = jnp.bfloat16

    def ln(t, g, b):
        m = jnp.mean(t, -1, keepdims=True)
        v = jnp.mean((t - m) ** 2, -1, keepdims=True)
        return (t - m) * jax.lax.rsqrt(v + _EPS) * g + b

    def mm(a, w):
        return jnp.dot(a.astype(bf16), w.astype(bf16),
                       preferred_element_type=jnp.float32)

    def gelu(t):
        return 0.5 * t * (1.0 + jax.lax.erf(t / _SQRT2))

    def split_heads(t):
        return t.reshape(B, N, heads, dh).transpose(0, 2, 1, 3)

    for L in params["layers"]:
        xn = ln(x, L["ln1_g"], L["ln1_b"])
        q, k, v = jnp.split(mm(xn, L["wqkv"]), 3, -1)
        q, k, v = split_heads(q), split_heads(k), split_heads(v)
        dots = jnp.einsum("bhid,bhjd->bhij", q.astype(bf16), k.astype(bf16),
                          preferred_element_type=jnp.float32) * scale
        if bias is not None:
            qb, kb, _ = jnp.split(mm(bias, L["wqkv"]), 3, -1)
            qb, kb = split_heads(qb), split_heads(kb)
            dots = dots + jnp.einsum("bhid,bhjd->bhij",
                                     qb.astype(bf16), kb.astype(bf16),
                                     preferred_element_type=jnp.float32) * scale
        dots = dots - jnp.max(dots, -1, keepdims=True)
        p = jnp.exp(dots)
        p = p / jnp.sum(p, -1, keepdims=True)
        o = jnp.einsum("bhij,bhjd->bhid", p.astype(bf16), v.astype(bf16),
                       preferred_element_type=jnp.float32)
        o = o.transpose(0, 2, 1, 3).reshape(B, N, heads * dh)
        x = x + (mm(o, L["wo"]) + L["bo"])

        xn = ln(x, L["ln2_g"], L["ln2_b"])
        h = gelu(mm(xn, L["w1"]) + L["b1"])
        x = x + (mm(h, L["w2"]) + L["b2"])
    return ln(x, params["final_g"], params["final_b"])


# --------------------------------------------------------------------------
if __name__ == "__main__":
    dim, depth, heads, dim_head, mult = 32, 2, 4, 8, 4
    B, N = 2, 8

    key = jax.random.PRNGKey(0)
    kp, kx, kb = jax.random.split(key, 3)
    params = init_params(kp, dim, depth, heads, dim_head, mult)
    x = jax.random.normal(kx, (B, N, dim), jnp.float32)
    bias = jax.random.normal(kb, (B, N, dim), jnp.float32)

    # no-bias path
    out = jax.block_until_ready(temporal_transformer_forward(params, x, bias=None))
    ref = jax.block_until_ready(ref_forward(params, x, bias=None))
    assert out.shape == (B, N, dim)
    assert jnp.allclose(out, ref, atol=2e-2, rtol=2e-2), \
        float(jnp.max(jnp.abs(out - ref)))

    # bias path
    out_b = jax.block_until_ready(temporal_transformer_forward(params, x, bias=bias))
    ref_b = jax.block_until_ready(ref_forward(params, x, bias=bias))
    assert jnp.allclose(out_b, ref_b, atol=2e-2, rtol=2e-2), \
        float(jnp.max(jnp.abs(out_b - ref_b)))

    print("KERNEL_OK")
</pallas_src>

<mosaic_0001>
module attributes {stable_mosaic.version = 11 : i64} {
  func.func @kernel(%arg0: i32, %arg1: memref<1x8x32xf32, #tpu.memory_space<vmem>>, %arg2: memref<1x32xf32, #tpu.memory_space<vmem>>, %arg3: memref<1x32xf32, #tpu.memory_space<vmem>>, %arg4: memref<32x96xbf16, #tpu.memory_space<vmem>>, %arg5: memref<32x32xbf16, #tpu.memory_space<vmem>>, %arg6: memref<1x32xf32, #tpu.memory_space<vmem>>, %arg7: memref<1x8x32xf32, #tpu.memory_space<vmem>>) attributes {dimension_semantics = [#tpu.dimension_semantics<parallel>], iteration_bounds = array<i64: 2>, scalar_prefetch = 0 : i64, scratch_operands = 0 : i64, tpu.core_type = #tpu.core_type<tc>, window_params = [{transform_indices = @transform_0, window_bounds = array<i64: 1, 8, 32>}, {pipeline_mode = #tpu.pipeline_mode<synchronous>, transform_indices = @transform_1, window_bounds = array<i64: 1, 32>}, {pipeline_mode = #tpu.pipeline_mode<synchronous>, transform_indices = @transform_2, window_bounds = array<i64: 1, 32>}, {pipeline_mode = #tpu.pipeline_mode<synchronous>, transform_indices = @transform_3, window_bounds = array<i64: 32, 96>}, {pipeline_mode = #tpu.pipeline_mode<synchronous>, transform_indices = @transform_4, window_bounds = array<i64: 32, 32>}, {pipeline_mode = #tpu.pipeline_mode<synchronous>, transform_indices = @transform_5, window_bounds = array<i64: 1, 32>}, {transform_indices = @transform_6, window_bounds = array<i64: 1, 8, 32>}]} {
    %c0 = arith.constant 0 : index
    %c0_0 = arith.constant 0 : index
    %c0_1 = arith.constant 0 : index
    %0 = vector.load %arg1[%c0, %c0_0, %c0_1] : memref<1x8x32xf32, #tpu.memory_space<vmem>>, vector<1x8x32xf32>
    %1 = vector.shape_cast %0 : vector<1x8x32xf32> to vector<8x32xf32>
    %c0_2 = arith.constant 0 : index
    %c0_3 = arith.constant 0 : index
    %2 = vector.load %arg2[%c0_2, %c0_3] : memref<1x32xf32, #tpu.memory_space<vmem>>, vector<1x32xf32>
    %c0_4 = arith.constant 0 : index
    %c0_5 = arith.constant 0 : index
    %3 = vector.load %arg3[%c0_4, %c0_5] : memref<1x32xf32, #tpu.memory_space<vmem>>, vector<1x32xf32>
    %cst = arith.constant dense<0.000000e+00> : vector<8xf32>
    %4 = vector.multi_reduction <add>, %1, %cst [1] : vector<8x32xf32> to vector<8xf32>
    %5 = vector.shape_cast %4 : vector<8xf32> to vector<8x1xf32>
    %cst_6 = arith.constant 3.200000e+01 : f32
    %6 = vector.broadcast %cst_6 : f32 to vector<8x1xf32>
    %7 = arith.divf %5, %6 : vector<8x1xf32>
    %8 = vector.broadcast %7 : vector<8x1xf32> to vector<8x32xf32>
    %9 = arith.subf %1, %8 : vector<8x32xf32>
    %10 = arith.mulf %9, %9 : vector<8x32xf32>
    %cst_7 = arith.constant dense<0.000000e+00> : vector<8xf32>
    %11 = vector.multi_reduction <add>, %10, %cst_7 [1] : vector<8x32xf32> to vector<8xf32>
    %12 = vector.shape_cast %11 : vector<8xf32> to vector<8x1xf32>
    %cst_8 = arith.constant 3.200000e+01 : f32
    %13 = vector.broadcast %cst_8 : f32 to vector<8x1xf32>
    %14 = arith.divf %12, %13 : vector<8x1xf32>
    %cst_9 = arith.constant 9.99999974E-6 : f32
    %15 = vector.broadcast %cst_9 : f32 to vector<8x1xf32>
    %16 = arith.addf %14, %15 : vector<8x1xf32>
    %17 = math.rsqrt %16 : vector<8x1xf32>
    %18 = vector.broadcast %17 : vector<8x1xf32> to vector<8x32xf32>
    %19 = arith.mulf %9, %18 : vector<8x32xf32>
    %20 = vector.broadcast %2 : vector<1x32xf32> to vector<8x32xf32>
    %21 = arith.mulf %19, %20 : vector<8x32xf32>
    %22 = vector.broadcast %3 : vector<1x32xf32> to vector<8x32xf32>
    %23 = arith.addf %21, %22 : vector<8x32xf32>
    %c0_10 = arith.constant 0 : index
    %c0_11 = arith.constant 0 : index
    %24 = vector.load %arg4[%c0_10, %c0_11] : memref<32x96xbf16, #tpu.memory_space<vmem>>, vector<32x96xbf16>
    %25 = arith.truncf %23 : vector<8x32xf32> to vector<8x32xbf16>
    %cst_12 = arith.constant dense<0.000000e+00> : vector<8x96xf32>
    %26 = tpu.matmul %25, %24, %cst_12 {dimension_numbers = #tpu.dot_dimension_numbers<[1], [0], [0], [1], [0, 0, 1, 1], [], []>} : vector<8x32xbf16>, vector<32x96xbf16>, vector<8x96xf32> -> vector<8x96xf32>
    %27 = vector.extract_strided_slice %26 {offsets = [0, 0], sizes = [8, 8], strides = [1, 1]} : vector<8x96xf32> to vector<8x8xf32>
    %28 = arith.truncf %27 : vector<8x8xf32> to vector<8x8xbf16>
    %29 = vector.extract_strided_slice %26 {offsets = [0, 32], sizes = [8, 8], strides = [1, 1]} : vector<8x96xf32> to vector<8x8xf32>
    %30 = arith.truncf %29 : vector<8x8xf32> to vector<8x8xbf16>
    %31 = vector.extract_strided_slice %26 {offsets = [0, 64], sizes = [8, 8], strides = [1, 1]} : vector<8x96xf32> to vector<8x8xf32>
    %32 = arith.truncf %31 : vector<8x8xf32> to vector<8x8xbf16>
    %cst_13 = arith.constant dense<0.000000e+00> : vector<8x8xf32>
    %33 = tpu.matmul %28, %30, %cst_13 {dimension_numbers = #tpu.dot_dimension_numbers<[1], [1], [0], [0], [0, 0, 1, 0], [], []>} : vector<8x8xbf16>, vector<8x8xbf16>, vector<8x8xf32> -> vector<8x8xf32>
    %cst_14 = arith.constant 0.353553385 : f32
    %34 = vector.broadcast %cst_14 : f32 to vector<8x8xf32>
    %35 = arith.mulf %33, %34 : vector<8x8xf32>
    %cst_15 = arith.constant dense<0xFF800000> : vector<8xf32>
    %36 = vector.multi_reduction <maximumf>, %35, %cst_15 [1] : vector<8x8xf32> to vector<8xf32>
    %37 = vector.shape_cast %36 : vector<8xf32> to vector<8x1xf32>
    %38 = vector.broadcast %37 : vector<8x1xf32> to vector<8x8xf32>
    %39 = arith.subf %35, %38 : vector<8x8xf32>
    %40 = math.exp %39 : vector<8x8xf32>
    %cst_16 = arith.constant dense<0.000000e+00> : vector<8xf32>
    %41 = vector.multi_reduction <add>, %40, %cst_16 [1] : vector<8x8xf32> to vector<8xf32>
    %42 = vector.shape_cast %41 : vector<8xf32> to vector<8x1xf32>
    %43 = tpu.reciprocal %42 {approx = true} : vector<8x1xf32> -> vector<8x1xf32>
    %44 = vector.broadcast %43 : vector<8x1xf32> to vector<8x8xf32>
    %45 = arith.mulf %40, %44 : vector<8x8xf32>
    %46 = arith.truncf %45 : vector<8x8xf32> to vector<8x8xbf16>
    %cst_17 = arith.constant dense<0.000000e+00> : vector<8x8xf32>
    %47 = tpu.matmul %46, %32, %cst_17 {dimension_numbers = #tpu.dot_dimension_numbers<[1], [0], [0], [1], [0, 0, 1, 1], [], []>} : vector<8x8xbf16>, vector<8x8xbf16>, vector<8x8xf32> -> vector<8x8xf32>
    %48 = vector.extract_strided_slice %26 {offsets = [0, 8], sizes = [8, 8], strides = [1, 1]} : vector<8x96xf32> to vector<8x8xf32>
    %49 = arith.truncf %48 : vector<8x8xf32> to vector<8x8xbf16>
    %50 = vector.extract_strided_slice %26 {offsets = [0, 40], sizes = [8, 8], strides = [1, 1]} : vector<8x96xf32> to vector<8x8xf32>
    %51 = arith.truncf %50 : vector<8x8xf32> to vector<8x8xbf16>
    %52 = vector.extract_strided_slice %26 {offsets = [0, 72], sizes = [8, 8], strides = [1, 1]} : vector<8x96xf32> to vector<8x8xf32>
    %53 = arith.truncf %52 : vector<8x8xf32> to vector<8x8xbf16>
    %cst_18 = arith.constant dense<0.000000e+00> : vector<8x8xf32>
    %54 = tpu.matmul %49, %51, %cst_18 {dimension_numbers = #tpu.dot_dimension_numbers<[1], [1], [0], [0], [0, 0, 1, 0], [], []>} : vector<8x8xbf16>, vector<8x8xbf16>, vector<8x8xf32> -> vector<8x8xf32>
    %cst_19 = arith.constant 0.353553385 : f32
    %55 = vector.broadcast %cst_19 : f32 to vector<8x8xf32>
    %56 = arith.mulf %54, %55 : vector<8x8xf32>
    %cst_20 = arith.constant dense<0xFF800000> : vector<8xf32>
    %57 = vector.multi_reduction <maximumf>, %56, %cst_20 [1] : vector<8x8xf32> to vector<8xf32>
    %58 = vector.shape_cast %57 : vector<8xf32> to vector<8x1xf32>
    %59 = vector.broadcast %58 : vector<8x1xf32> to vector<8x8xf32>
    %60 = arith.subf %56, %59 : vector<8x8xf32>
    %61 = math.exp %60 : vector<8x8xf32>
    %cst_21 = arith.constant dense<0.000000e+00> : vector<8xf32>
    %62 = vector.multi_reduction <add>, %61, %cst_21 [1] : vector<8x8xf32> to vector<8xf32>
    %63 = vector.shape_cast %62 : vector<8xf32> to vector<8x1xf32>
    %64 = tpu.reciprocal %63 {approx = true} : vector<8x1xf32> -> vector<8x1xf32>
    %65 = vector.broadcast %64 : vector<8x1xf32> to vector<8x8xf32>
    %66 = arith.mulf %61, %65 : vector<8x8xf32>
    %67 = arith.truncf %66 : vector<8x8xf32> to vector<8x8xbf16>
    %cst_22 = arith.constant dense<0.000000e+00> : vector<8x8xf32>
    %68 = tpu.matmul %67, %53, %cst_22 {dimension_numbers = #tpu.dot_dimension_numbers<[1], [0], [0], [1], [0, 0, 1, 1], [], []>} : vector<8x8xbf16>, vector<8x8xbf16>, vector<8x8xf32> -> vector<8x8xf32>
    %69 = vector.extract_strided_slice %26 {offsets = [0, 16], sizes = [8, 8], strides = [1, 1]} : vector<8x96xf32> to vector<8x8xf32>
    %70 = arith.truncf %69 : vector<8x8xf32> to vector<8x8xbf16>
    %71 = vector.extract_strided_slice %26 {offsets = [0, 48], sizes = [8, 8], strides = [1, 1]} : vector<8x96xf32> to vector<8x8xf32>
    %72 = arith.truncf %71 : vector<8x8xf32> to vector<8x8xbf16>
    %73 = vector.extract_strided_slice %26 {offsets = [0, 80], sizes = [8, 8], strides = [1, 1]} : vector<8x96xf32> to vector<8x8xf32>
    %74 = arith.truncf %73 : vector<8x8xf32> to vector<8x8xbf16>
    %cst_23 = arith.constant dense<0.000000e+00> : vector<8x8xf32>
    %75 = tpu.matmul %70, %72, %cst_23 {dimension_numbers = #tpu.dot_dimension_numbers<[1], [1], [0], [0], [0, 0, 1, 0], [], []>} : vector<8x8xbf16>, vector<8x8xbf16>, vector<8x8xf32> -> vector<8x8xf32>
    %cst_24 = arith.constant 0.353553385 : f32
    %76 = vector.broadcast %cst_24 : f32 to vector<8x8xf32>
    %77 = arith.mulf %75, %76 : vector<8x8xf32>
    %cst_25 = arith.constant dense<0xFF800000> : vector<8xf32>
    %78 = vector.multi_reduction <maximumf>, %77, %cst_25 [1] : vector<8x8xf32> to vector<8xf32>
    %79 = vector.shape_cast %78 : vector<8xf32> to vector<8x1xf32>
    %80 = vector.broadcast %79 : vector<8x1xf32> to vector<8x8xf32>
    %81 = arith.subf %77, %80 : vector<8x8xf32>
    %82 = math.exp %81 : vector<8x8xf32>
    %cst_26 = arith.constant dense<0.000000e+00> : vector<8xf32>
    %83 = vector.multi_reduction <add>, %82, %cst_26 [1] : vector<8x8xf32> to vector<8xf32>
    %84 = vector.shape_cast %83 : vector<8xf32> to vector<8x1xf32>
    %85 = tpu.reciprocal %84 {approx = true} : vector<8x1xf32> -> vector<8x1xf32>
    %86 = vector.broadcast %85 : vector<8x1xf32> to vector<8x8xf32>
    %87 = arith.mulf %82, %86 : vector<8x8xf32>
    %88 = arith.truncf %87 : vector<8x8xf32> to vector<8x8xbf16>
    %cst_27 = arith.constant dense<0.000000e+00> : vector<8x8xf32>
    %89 = tpu.matmul %88, %74, %cst_27 {dimension_numbers = #tpu.dot_dimension_numbers<[1], [0], [0], [1], [0, 0, 1, 1], [], []>} : vector<8x8xbf16>, vector<8x8xbf16>, vector<8x8xf32> -> vector<8x8xf32>
    %90 = vector.extract_strided_slice %26 {offsets = [0, 24], sizes = [8, 8], strides = [1, 1]} : vector<8x96xf32> to vector<8x8xf32>
    %91 = arith.truncf %90 : vector<8x8xf32> to vector<8x8xbf16>
    %92 = vector.extract_strided_slice %26 {offsets = [0, 56], sizes = [8, 8], strides = [1, 1]} : vector<8x96xf32> to vector<8x8xf32>
    %93 = arith.truncf %92 : vector<8x8xf32> to vector<8x8xbf16>
    %94 = vector.extract_strided_slice %26 {offsets = [0, 88], sizes = [8, 8], strides = [1, 1]} : vector<8x96xf32> to vector<8x8xf32>
    %95 = arith.truncf %94 : vector<8x8xf32> to vector<8x8xbf16>
    %cst_28 = arith.constant dense<0.000000e+00> : vector<8x8xf32>
    %96 = tpu.matmul %91, %93, %cst_28 {dimension_numbers = #tpu.dot_dimension_numbers<[1], [1], [0], [0], [0, 0, 1, 0], [], []>} : vector<8x8xbf16>, vector<8x8xbf16>, vector<8x8xf32> -> vector<8x8xf32>
    %cst_29 = arith.constant 0.353553385 : f32
    %97 = vector.broadcast %cst_29 : f32 to vector<8x8xf32>
    %98 = arith.mulf %96, %97 : vector<8x8xf32>
    %cst_30 = arith.constant dense<0xFF800000> : vector<8xf32>
    %99 = vector.multi_reduction <maximumf>, %98, %cst_30 [1] : vector<8x8xf32> to vector<8xf32>
    %100 = vector.shape_cast %99 : vector<8xf32> to vector<8x1xf32>
    %101 = vector.broadcast %100 : vector<8x1xf32> to vector<8x8xf32>
    %102 = arith.subf %98, %101 : vector<8x8xf32>
    %103 = math.exp %102 : vector<8x8xf32>
    %cst_31 = arith.constant dense<0.000000e+00> : vector<8xf32>
    %104 = vector.multi_reduction <add>, %103, %cst_31 [1] : vector<8x8xf32> to vector<8xf32>
    %105 = vector.shape_cast %104 : vector<8xf32> to vector<8x1xf32>
    %106 = tpu.reciprocal %105 {approx = true} : vector<8x1xf32> -> vector<8x1xf32>
    %107 = vector.broadcast %106 : vector<8x1xf32> to vector<8x8xf32>
    %108 = arith.mulf %103, %107 : vector<8x8xf32>
    %109 = arith.truncf %108 : vector<8x8xf32> to vector<8x8xbf16>
    %cst_32 = arith.constant dense<0.000000e+00> : vector<8x8xf32>
    %110 = tpu.matmul %109, %95, %cst_32 {dimension_numbers = #tpu.dot_dimension_numbers<[1], [0], [0], [1], [0, 0, 1, 1], [], []>} : vector<8x8xbf16>, vector<8x8xbf16>, vector<8x8xf32> -> vector<8x8xf32>
    %111 = tpu.concatenate %47, %68, %89, %110 in 1 : vector<8x8xf32>, vector<8x8xf32>, vector<8x8xf32>, vector<8x8xf32> -> vector<8x32xf32>
    %112 = arith.truncf %111 : vector<8x32xf32> to vector<8x32xbf16>
    %c0_33 = arith.constant 0 : index
    %c0_34 = arith.constant 0 : index
    %113 = vector.load %arg5[%c0_33, %c0_34] : memref<32x32xbf16, #tpu.memory_space<vmem>>, vector<32x32xbf16>
    %cst_35 = arith.constant dense<0.000000e+00> : vector<8x32xf32>
    %114 = tpu.matmul %112, %113, %cst_35 {dimension_numbers = #tpu.dot_dimension_numbers<[1], [0], [0], [1], [0, 0, 1, 1], [], []>} : vector<8x32xbf16>, vector<32x32xbf16>, vector<8x32xf32> -> vector<8x32xf32>
    %c0_36 = arith.constant 0 : index
    %c0_37 = arith.constant 0 : index
    %115 = vector.load %arg6[%c0_36, %c0_37] : memref<1x32xf32, #tpu.memory_space<vmem>>, vector<1x32xf32>
    %116 = vector.broadcast %115 : vector<1x32xf32> to vector<8x32xf32>
    %117 = arith.addf %114, %116 : vector<8x32xf32>
    %118 = arith.addf %1, %117 : vector<8x32xf32>
    %c0_38 = arith.constant 0 : index
    %c0_39 = arith.constant 0 : index
    %c0_40 = arith.constant 0 : index
    %119 = vector.load %arg7[%c0_38, %c0_39, %c0_40] : memref<1x8x32xf32, #tpu.memory_space<vmem>>, vector<1x8x32xf32>
    %120 = vector.shape_cast %119 : vector<1x8x32xf32> to vector<8x32xf32>
    %121 = vector.shape_cast %118 : vector<8x32xf32> to vector<1x8x32xf32>
    tpu.vector_store %arg7[%c0_38, %c0_39, %c0_40], %121 {strides = array<i32>} : memref<1x8x32xf32, #tpu.memory_space<vmem>>, vector<1x8x32xf32>,
    return
  }
  func.func @transform_0(%arg0: i32) -> (i32, i32, i32) {
    %c0_i32 = arith.constant 0 : i32
    %c0_i32_0 = arith.constant 0 : i32
    %c0_i32_1 = arith.constant 0 : i32
    return %arg0, %c0_i32, %c0_i32_0 : i32, i32, i32
  }
  func.func @transform_1(%arg0: i32) -> (i32, i32) {
    %c0_i32 = arith.constant 0 : i32
    %c0_i32_0 = arith.constant 0 : i32
    %c0_i32_1 = arith.constant 0 : i32
    return %c0_i32, %c0_i32_0 : i32, i32
  }
  func.func @transform_2(%arg0: i32) -> (i32, i32) {
    %c0_i32 = arith.constant 0 : i32
    %c0_i32_0 = arith.constant 0 : i32
    %c0_i32_1 = arith.constant 0 : i32
    return %c0_i32, %c0_i32_0 : i32, i32
  }
  func.func @transform_3(%arg0: i32) -> (i32, i32) {
    %c0_i32 = arith.constant 0 : i32
    %c0_i32_0 = arith.constant 0 : i32
    %c0_i32_1 = arith.constant 0 : i32
    return %c0_i32, %c0_i32_0 : i32, i32
  }
  func.func @transform_4(%arg0: i32) -> (i32, i32) {
    %c0_i32 = arith.constant 0 : i32
    %c0_i32_0 = arith.constant 0 : i32
    %c0_i32_1 = arith.constant 0 : i32
    return %c0_i32, %c0_i32_0 : i32, i32
  }
  func.func @transform_5(%arg0: i32) -> (i32, i32) {
    %c0_i32 = arith.constant 0 : i32
    %c0_i32_0 = arith.constant 0 : i32
    %c0_i32_1 = arith.constant 0 : i32
    return %c0_i32, %c0_i32_0 : i32, i32
  }
  func.func @transform_6(%arg0: i32) -> (i32, i32, i32) {
    %c0_i32 = arith.constant 0 : i32
    %c0_i32_0 = arith.constant 0 : i32
    %c0_i32_1 = arith.constant 0 : i32
    return %arg0, %c0_i32, %c0_i32_0 : i32, i32, i32
  }
}

</mosaic_0001>

<llo_original>
// kernel: tpu_custom_call.1
$region0: #{tpu_custom_call.1}
  #allocation0 [shape = 'u32[]', space=smem, size = 0x4, offset = 0x4, fixed_abs, tag = 'smem constant byte address 0x4 - core index']
  #allocation1 [shape = 'u32[72,128]{1,0:T(1,128)}', space=vmem, size = 0x9000, scoped, tag = 'internal scratch']
  %s0 = inlined_call_operand.hbm [shape: f32[2,8,32], index: 0, kind: input, shape index: {}]
  %s1 = inlined_call_operand.hbm [shape: f32[1,32], index: 1, kind: input, shape index: {}]
  %s2 = inlined_call_operand.vmem [shape: f32[1,32], index: 2, kind: input, shape index: {}]
  %s3 = inlined_call_operand.hbm [shape: bf16[32,96], index: 3, kind: input, shape index: {}]
  %s4 = inlined_call_operand.hbm [shape: bf16[32,32], index: 4, kind: input, shape index: {}]
  %s5 = inlined_call_operand.vmem [shape: f32[1,32], index: 5, kind: input, shape index: {}]
  %s6 = inlined_call_operand.hbm [shape: f32[2,8,32], index: 6, kind: output, shape index: {}]
  %s7 = sld [smem:[#allocation0]]
  $region73: #{tpu_custom_call.1} parent=0
    _
  %s9 = ssub.s32 1, %s7
  %s10 = scalar_select 0, %s9, %s7
  $region1: #{tpu_custom_call.1} parent=0
    #allocation2 [shape = 'u8[8192]{0}', space=vmem, size = 0x2000, scoped, tag = 'input window, operand 0']
    #allocation3 [shape = 's32[2]{0}', space=sflag, size = 0x8, scoped, tag = 'scoped memory for tpu_custom_call.1']
    #allocation4 [shape = 's32[2]{0}', space=sflag, size = 0x8, scoped, tag = 'scoped memory for tpu_custom_call.1']
    #allocation5 [shape = 'u8[512]{0}', space=vmem, size = 0x400, scoped, tag = 'input window, operand 1, single buffered']
    #allocation6 [shape = 's32[1]{0}', space=sflag, size = 0x4, scoped, tag = 'scoped memory for tpu_custom_call.1']
    #allocation7 [shape = 'u8[8192]{0}', space=vmem, size = 0x2000, scoped, tag = 'input window, operand 3, single buffered']
    #allocation8 [shape = 'u8[8192]{0}', space=vmem, size = 0x2000, scoped, tag = 'input window, operand 4, single buffered']
    #allocation9 [shape = 's32[1]{0}', space=sflag, size = 0x4, scoped, tag = 'scoped memory for tpu_custom_call.1']
    #allocation10 [shape = 'u8[8192]{0}', space=vmem, size = 0x2000, scoped, tag = 'output window, operand 0']
    %11 = vsyncpa [#allocation3], 0
    %s12 = scalar_lea.sflag [#allocation3], 1
    %13 = vsyncpa %s12, 0
    %14 = vsyncpa [#allocation6], 0
    %15 = vsyncpa [#allocation9], 0
    %16 = vsyncpa [#allocation4], 0
    %s17 = scalar_lea.sflag [#allocation4], 1
    %18 = vsyncpa %s17, 0
    loop: start=0, step=1, limit=4
    $region2: #{tpu_custom_call.1} parent=1 // loop_pre_header
      _
    $region3: #{tpu_custom_call.1} parent=1 // loop_header
      %s20 = sphi 0, %s24
      %p21 = scmp.ge.s32.totalorder %s20, 4
      %s30 = sphi 0, %s32
      %s33 = sphi 0, %s30
      %s34 = sphi 0, %s33
      %s50 = sphi 0, %s34
      %s54 = sphi 0, %s54
      %s56 = sphi 0, %s54
      %s57 = sphi 0, %s56
      %s71 = sphi 0, %s57
      %s75 = sphi 0, %s75
      %s77 = sphi 0, %s75
      %s78 = sphi 0, %s77
      %s92 = sphi 0, %s78
      %s96 = sphi 0, %s96
      %s98 = sphi 0, %s96
      %s99 = sphi 0, %s98
      %s113 = sphi 0, %s99
      %s117 = sphi 0, %s117
      %s119 = sphi 0, %s117
      %s120 = sphi 0, %s119
      %s134 = sphi 0, %s120
      %s138 = sphi 0, %s138
      %s140 = sphi 0, %s138
      %s141 = sphi 0, %s140
      %s155 = sphi 0, %s141
      %s161 = sphi 0, %s163
      %s164 = sphi 0, %s161
      %s165 = sphi 0, %s164
      %s181 = sphi 0, %s165
    $region4: #{tpu_custom_call.1} parent=1 // loop_header_branch
      %23 = sbr.rel (%p21) target = $region8
    $region5: #{tpu_custom_call.1} parent=1 // loop_body
      %s25 = ssub.s32 %s20, 1
      %s26 = ssub.s32 %s20, 2
      %s27 = sadd.s32 %s20, 1
      %s28 = ssub.s32 %s20, %s27
      %p29 = scmp.eq.s32.totalorder %s28, 0
      %s31 = sadd.s32 %s30, 1
      %s32 = scalar_select %p29, %s30, %s31
      %p35 = pneg %p29
      %p36 = scmp.eq.s32.totalorder %s20, 1
      %p37 = por %p35, %p36
      %p38 = scmp.ne.s32.totalorder %s30, %s33
      %p39 = scmp.eq.s32.totalorder %s20, 0
      %p40 = por %p38, %p39
      %p41 = scmp.ne.s32.totalorder %s30, %s33
      %p42 = scmp.eq.s32.totalorder %s25, 1
      %p43 = por %p41, %p42
      %p44 = scmp.ne.s32.totalorder %s33, %s34
      %p45 = scmp.eq.s32.totalorder %s25, 0
      %p46 = por %p44, %p45
      %p47 = scmp.ne.s32.totalorder %s33, %s34
      %p48 = scmp.eq.s32.totalorder %s26, 1
      %p49 = por %p47, %p48
      %p51 = scmp.ne.s32.totalorder %s34, %s50
      %p52 = scmp.eq.s32.totalorder %s26, 0
      %p53 = por %p51, %p52
      %s55 = sadd.s32 %s54, 1
      %p58 = scmp.eq.s32.totalorder %s20, 1
      %p59 = scmp.ne.s32.totalorder %s54, %s56
      %p60 = scmp.eq.s32.totalorder %s20, 0
      %p61 = por %p59, %p60
      %p62 = scmp.ne.s32.totalorder %s54, %s56
      %p63 = scmp.eq.s32.totalorder %s25, 1
      %p64 = por %p62, %p63
      %p65 = scmp.ne.s32.totalorder %s56, %s57
      %p66 = scmp.eq.s32.totalorder %s25, 0
      %p67 = por %p65, %p66
      %p68 = scmp.ne.s32.totalorder %s56, %s57
      %p69 = scmp.eq.s32.totalorder %s26, 1
      %p70 = por %p68, %p69
      %p72 = scmp.ne.s32.totalorder %s57, %s71
      %p73 = scmp.eq.s32.totalorder %s26, 0
      %p74 = por %p72, %p73
      %s76 = sadd.s32 %s75, 1
      %p79 = scmp.eq.s32.totalorder %s20, 1
      %p80 = scmp.ne.s32.totalorder %s75, %s77
      %p81 = scmp.eq.s32.totalorder %s20, 0
      %p82 = por %p80, %p81
      %p83 = scmp.ne.s32.totalorder %s75, %s77
      %p84 = scmp.eq.s32.totalorder %s25, 1
      %p85 = por %p83, %p84
      %p86 = scmp.ne.s32.totalorder %s77, %s78
      %p87 = scmp.eq.s32.totalorder %s25, 0
      %p88 = por %p86, %p87
      %p89 = scmp.ne.s32.totalorder %s77, %s78
      %p90 = scmp.eq.s32.totalorder %s26, 1
      %p91 = por %p89, %p90
      %p93 = scmp.ne.s32.totalorder %s78, %s92
      %p94 = scmp.eq.s32.totalorder %s26, 0
      %p95 = por %p93, %p94
      %s97 = sadd.s32 %s96, 1
      %p100 = scmp.eq.s32.totalorder %s20, 1
      %p101 = scmp.ne.s32.totalorder %s96, %s98
      %p102 = scmp.eq.s32.totalorder %s20, 0
      %p103 = por %p101, %p102
      %p104 = scmp.ne.s32.totalorder %s96, %s98
      %p105 = scmp.eq.s32.totalorder %s25, 1
      %p106 = por %p104, %p105
      %p107 = scmp.ne.s32.totalorder %s98, %s99
      %p108 = scmp.eq.s32.totalorder %s25, 0
      %p109 = por %p107, %p108
      %p110 = scmp.ne.s32.totalorder %s98, %s99
      %p111 = scmp.eq.s32.totalorder %s26, 1
      %p112 = por %p110, %p111
      %p114 = scmp.ne.s32.totalorder %s99, %s113
      %p115 = scmp.eq.s32.totalorder %s26, 0
      %p116 = por %p114, %p115
      %s118 = sadd.s32 %s117, 1
      %p121 = scmp.eq.s32.totalorder %s20, 1
      %p122 = scmp.ne.s32.totalorder %s117, %s119
      %p123 = scmp.eq.s32.totalorder %s20, 0
      %p124 = por %p122, %p123
      %p125 = scmp.ne.s32.totalorder %s117, %s119
      %p126 = scmp.eq.s32.totalorder %s25, 1
      %p127 = por %p125, %p126
      %p128 = scmp.ne.s32.totalorder %s119, %s120
      %p129 = scmp.eq.s32.totalorder %s25, 0
      %p130 = por %p128, %p129
      %p131 = scmp.ne.s32.totalorder %s119, %s120
      %p132 = scmp.eq.s32.totalorder %s26, 1
      %p133 = por %p131, %p132
      %p135 = scmp.ne.s32.totalorder %s120, %s134
      %p136 = scmp.eq.s32.totalorder %s26, 0
      %p137 = por %p135, %p136
      %s139 = sadd.s32 %s138, 1
      %p142 = scmp.eq.s32.totalorder %s20, 1
      %p143 = scmp.ne.s32.totalorder %s138, %s140
      %p144 = scmp.eq.s32.totalorder %s20, 0
      %p145 = por %p143, %p144
      %p146 = scmp.ne.s32.totalorder %s138, %s140
      %p147 = scmp.eq.s32.totalorder %s25, 1
      %p148 = por %p146, %p147
      %p149 = scmp.ne.s32.totalorder %s140, %s141
      %p150 = scmp.eq.s32.totalorder %s25, 0
      %p151 = por %p149, %p150
      %p152 = scmp.ne.s32.totalorder %s140, %s141
      %p153 = scmp.eq.s32.totalorder %s26, 1
      %p154 = por %p152, %p153
      %p156 = scmp.ne.s32.totalorder %s141, %s155
      %p157 = scmp.eq.s32.totalorder %s26, 0
      %p158 = por %p156, %p157
      %s159 = ssub.s32 %s20, %s27
      %p160 = scmp.eq.s32.totalorder %s159, 0
      %s162 = sadd.s32 %s161, 1
      %s163 = scalar_select %p160, %s161, %s162
      %p166 = pneg %p160
      %p167 = scmp.eq.s32.totalorder %s20, 1
      %p168 = por %p166, %p167
      %p169 = scmp.ne.s32.totalorder %s161, %s164
      %p170 = scmp.eq.s32.totalorder %s20, 0
      %p171 = por %p169, %p170
      %p172 = scmp.ne.s32.totalorder %s161, %s164
      %p173 = scmp.eq.s32.totalorder %s25, 1
      %p174 = por %p172, %p173
      %p175 = scmp.ne.s32.totalorder %s164, %s165
      %p176 = scmp.eq.s32.totalorder %s25, 0
      %p177 = por %p175, %p176
      %p178 = scmp.ne.s32.totalorder %s164, %s165
      %p179 = scmp.eq.s32.totalorder %s26, 1
      %p180 = por %p178, %p179
      %p182 = scmp.ne.s32.totalorder %s165, %s181
      %p183 = scmp.eq.s32.totalorder %s26, 0
      %p184 = por %p182, %p183
      %p185 = scmp.le.s32.totalorder 1, %s20
      %p186 = scmp.lt.s32.totalorder %s20, 3
      %p187 = pnand %p185, %p186
      %p188 = pneg %p187
      // Predicated region
      $region9: #{tpu_custom_call.1} parent=5 // pred_check
        _
      $region10: #{tpu_custom_call.1} parent=5 // pred_check_branch
        %190 = sbr.rel (%p187) target = $region12
      $region11: #{tpu_custom_call.1} parent=5 // pred_region
        %s191 = ssub.s32 %s20, 1
        // Predicated region
        $region13: #{tpu_custom_call.1} parent=11 // pred_check
          %p192 = pneg %p67
        $region14: #{tpu_custom_call.1} parent=11 // pred_check_branch
          %194 = sbr.rel (%p192) target = $region16
        $region15: #{tpu_custom_call.1} parent=11 // pred_region
          %196 = vsyncadd [#allocation6], 0
          %s198 = sshll.u32 %s1, 4
          %s199 = int_to_ptr.hbm [resolvable:$true] %s198
          %s200 = sshll.u32 [#allocation5], 4
          %s201 = int_to_ptr.vmem [resolvable:$true] %s200
          %203 = dma.hbm_to_vmem [thread:$0]  %s199, 16, %s201, [#allocation6]
        $region16: #{tpu_custom_call.1} parent=11 // pred_fallthru
          _
        // Predicated region
        $region17: #{tpu_custom_call.1} parent=11 // pred_check
          %p204 = pneg %p88
        $region18: #{tpu_custom_call.1} parent=11 // pred_check_branch
          %206 = sbr.rel (%p204) target = $region20
        $region19: #{tpu_custom_call.1} parent=11 // pred_region
          _
        $region20: #{tpu_custom_call.1} parent=11 // pred_fallthru
          _
        // Predicated region
        $region21: #{tpu_custom_call.1} parent=11 // pred_check
          %p207 = pneg %p109
        $region22: #{tpu_custom_call.1} parent=11 // pred_check_branch
          %209 = sbr.rel (%p207) target = $region24
        $region23: #{tpu_custom_call.1} parent=11 // pred_region
          %211 = vsyncadd [#allocation6], 0
          %s212 = sshll.u32 %s3, 4
          %s213 = int_to_ptr.hbm [resolvable:$true] %s212
          %s214 = sshll.u32 [#allocation7], 4
          %s215 = int_to_ptr.vmem [resolvable:$true] %s214
          %220 = dma.hbm_to_vmem [thread:$0]  %s213, 256, %s215, [#allocation6], 64, 64, 4
        $region24: #{tpu_custom_call.1} parent=11 // pred_fallthru
          _
        // Predicated region
        $region25: #{tpu_custom_call.1} parent=11 // pred_check
          %p221 = pneg %p130
        $region26: #{tpu_custom_call.1} parent=11 // pred_check_branch
          %223 = sbr.rel (%p221) target = $region28
        $region27: #{tpu_custom_call.1} parent=11 // pred_region
          %225 = vsyncadd [#allocation9], 0
          %s226 = sshll.u32 %s4, 4
          %s227 = int_to_ptr.hbm [resolvable:$true] %s226
          %s228 = sshll.u32 [#allocation8], 4
          %s229 = int_to_ptr.vmem [resolvable:$true] %s228
          %234 = dma.hbm_to_vmem [thread:$0]  %s227, 256, %s229, [#allocation9], 64, 64, 4
        $region28: #{tpu_custom_call.1} parent=11 // pred_fallthru
          _
        // Predicated region
        $region29: #{tpu_custom_call.1} parent=11 // pred_check
          %p235 = pneg %p151
        $region30: #{tpu_custom_call.1} parent=11 // pred_check_branch
          %237 = sbr.rel (%p235) target = $region32
        $region31: #{tpu_custom_call.1} parent=11 // pred_region
          _
        $region32: #{tpu_custom_call.1} parent=11 // pred_fallthru
          _
      $region12: #{tpu_custom_call.1} parent=5 // pred_fallthru
        _
      %p238 = scmp.lt.s32.totalorder %s20, 2
      // Predicated region
      $region33: #{tpu_custom_call.1} parent=5 // pred_check
        %p239 = pneg %p238
      $region34: #{tpu_custom_call.1} parent=5 // pred_check_branch
        %241 = sbr.rel (%p239) target = $region36
      $region35: #{tpu_custom_call.1} parent=5 // pred_region
        // Predicated region
        $region37: #{tpu_custom_call.1} parent=35 // pred_check
          %p242 = pneg %p40
        $region38: #{tpu_custom_call.1} parent=35 // pred_check_branch
          %244 = sbr.rel (%p242) target = $region40
        $region39: #{tpu_custom_call.1} parent=35 // pred_region
          %s245 = sand.u32 %s30, 1
          %s246 = scalar_lea.sflag [#allocation3], %s245
          %s247 = sand.u32 %s30, 1
          %s248 = smul.addr %s247, 8
          %s249 = scalar_lea.vmem [#allocation2], %s248
          %251 = vsyncadd %s246, 0
          %s252 = smul.addr %s20, 8
          %s253 = scalar_lea.hbm %s0, %s252
          %s255 = sshll.u32 %s253, 4
          %s256 = int_to_ptr.hbm [resolvable:$true] %s255
          %s257 = sshll.u32 %s249, 4
          %s258 = int_to_ptr.vmem [resolvable:$true] %s257
          %260 = dma.hbm_to_vmem [thread:$0]  %s256, 128, %s258, %s246
        $region40: #{tpu_custom_call.1} parent=35 // pred_fallthru
          _
      $region36: #{tpu_custom_call.1} parent=5 // pred_fallthru
        _
      %p261 = scmp.le.s32.totalorder 1, %s20
      %p262 = scmp.lt.s32.totalorder %s20, 3
      %p263 = pnand %p261, %p262
      %p264 = pneg %p263
      // Predicated region
      $region41: #{tpu_custom_call.1} parent=5 // pred_check
        _
      $region42: #{tpu_custom_call.1} parent=5 // pred_check_branch
        %266 = sbr.rel (%p263) target = $region44
      $region43: #{tpu_custom_call.1} parent=5 // pred_region
        %s267 = ssub.s32 %s20, 1
        %s268 = sand.u32 %s33, 1
        %s269 = scalar_lea.sflag [#allocation3], %s268
        %s270 = sand.u32 %s33, 1
        %s271 = smul.addr %s270, 8
        %s272 = scalar_lea.vmem [#allocation2], %s271
        // Predicated region
        $region45: #{tpu_custom_call.1} parent=43 // pred_check
          %p273 = pneg %p46
        $region46: #{tpu_custom_call.1} parent=43 // pred_check_branch
          %275 = sbr.rel (%p273) target = $region48
        $region47: #{tpu_custom_call.1} parent=43 // pred_region
          %277 = dma.done %s269, 128
        $region48: #{tpu_custom_call.1} parent=43 // pred_fallthru
          _
        // Predicated region
        $region49: #{tpu_custom_call.1} parent=43 // pred_check
          %p278 = pneg %p67
        $region50: #{tpu_custom_call.1} parent=43 // pred_check_branch
          %280 = sbr.rel (%p278) target = $region52
        $region51: #{tpu_custom_call.1} parent=43 // pred_region
          %282 = dma.done [#allocation6], 16
        $region52: #{tpu_custom_call.1} parent=43 // pred_fallthru
          _
        // Predicated region
        $region53: #{tpu_custom_call.1} parent=43 // pred_check
          %p283 = pneg %p109
        $region54: #{tpu_custom_call.1} parent=43 // pred_check_branch
          %285 = sbr.rel (%p283) target = $region56
        $region55: #{tpu_custom_call.1} parent=43 // pred_region
          %287 = dma.done [#allocation6], 256
        $region56: #{tpu_custom_call.1} parent=43 // pred_fallthru
          _
        // Predicated region
        $region57: #{tpu_custom_call.1} parent=43 // pred_check
          %p288 = pneg %p130
        $region58: #{tpu_custom_call.1} parent=43 // pred_check_branch
          %290 = sbr.rel (%p288) target = $region60
        $region59: #{tpu_custom_call.1} parent=43 // pred_region
          %292 = dma.done [#allocation9], 256
        $region60: #{tpu_custom_call.1} parent=43 // pred_fallthru
          _
        %s293 = sand.u32 %s33, 1
        %s294 = scalar_lea.sflag [#allocation3], %s293
        %s295 = sand.u32 %s33, 1
        %s296 = smul.addr %s295, 8
        %s297 = scalar_lea.vmem [#allocation2], %s296
        %p298 = pneg %p46
        %p299 = pneg %p43
        %p300 = pneg %p67
        %p301 = pneg %p64
        %p302 = pneg %p88
        %p303 = pneg %p85
        %p304 = pneg %p109
        %p305 = pneg %p106
        %p306 = pneg %p130
        %p307 = pneg %p127
        %p308 = pneg %p151
        %p309 = pneg %p148
        %p310 = pneg %p177
        %p311 = pneg %p174
        %s312 = sand.u32 %s164, 1
        %s313 = scalar_lea.sflag [#allocation4], %s312
        %s314 = sand.u32 %s164, 1
        %s315 = smul.addr %s314, 8
        %s316 = scalar_lea.vmem [#allocation10], %s315
        %v318 = vld [vmem:[%s272] sm:$0xff]
        %v319 = vld [vmem:[#allocation5] sm:$0x1]
        %v320 = vld [vmem:[%s2] sm:$0x1]
        %vm321 = vcmask 261120
        %v322 = vsel %vm321, %v318, 0.0
        %323 = vadd.xlane.f32.xlu0 %v322
        %v324 = vpop.xlane.xlu0 %323
        %v325 = vrcp.pop 32.0
        %v326 = vmul.f32 32.0, %v325
        %v327 = vsub.f32 1.0, %v326
        %v328 = vmul.f32 %v325, %v327
        %v329 = vadd.f32 %v325, %v328
        %vm330 = vweird.f32 %v325
        %v331 = vsel %vm330, %v325, %v329
        %v332 = vmul.f32 %v324, %v331
        %v333 = vsub.f32 %v318, %v332
        %v334 = vmul.f32 %v333, %v333
        %v335 = vsel %vm321, %v334, 0.0
        %336 = vadd.xlane.f32.xlu0 %v335
        %v337 = vpop.xlane.xlu0 %336
        %v338 = vmul.f32 %v337, %v331
        %v339 = vadd.f32 %v338, 1e-05
        %v340 = vrsqrt.pop %v339
        %v341 = vmul.f32 %v340, %v339
        %v342 = vmul.f32 %v341, %v340
        %v343 = vmul.f32 0.5, %v342
        %v344 = vsub.f32 1.5, %v343
        %v345 = vmul.f32 %v340, %v344
        %vm346 = vweird.f32 %v339
        %vm347 = vweird.f32 %v340
        %vm348 = vmor %vm346, %vm347
        %v349 = vsel %vm348, %v340, %v345
        %v350 = vmul.f32 %v333, %v349
        %v352 = vperm.slane %v319, 0
        %v354 = vmul.f32 %v350, %v352
        %v356 = vperm.slane %v320, 0
        %v358 = vadd.f32 %v354, %v356
        %v359 = vld [vmem:[#allocation7] sm:$0xf]
        %v360 = vld [vmem:[#allocation7 + $0x4] sm:$0xf]
        %v361 = vld [vmem:[#allocation7 + $0x8] sm:$0xf]
        %v362 = vld [vmem:[#allocation7 + $0xc] sm:$0xf]
        %v363 = vpack.c.bf16 %v358, %v358
        %v368 = vunpack.c.l.b16 %v359
        %v369 = vunpack.c.l.b16 %v360
        %v370 = vunpack.c.l.b16 %v361
        %v371 = vunpack.c.l.b16 %v362
        %v372 = vpack.c.b16 %v369, %v368
        %v373 = vpack.c.b16 %v371, %v370
        %v377 = vsel %vm321, %v363, 0
        %379 = vmatpush.bf16.msra.mxu0 0
        %380 = vmatpush.bf16.msra.mxu0 0
        %381 = vmatpush.bf16.msra.mxu0 0
        %382 = vmatpush.bf16.msra.mxu0 0
        %383 = vmatpush.bf16.msra.mxu0 0
        %384 = vmatpush.bf16.msra.mxu0 0
        %385 = vmatpush.bf16.msra.mxu0 %v373
        %386 = vmatpush.bf16.msra.mxu0 %v372
        %387 = vmatmul.bf16.gmra.mxu0 %v377
        %v388 = vpop.f32.mrf.mxu0
        %v389 = vadd.f32 0.0, %v388
        %v390 = vpop.f32.mrf.mxu0
        %391 = vdwg.mxu0
        %v392 = vpack.c.bf16 %v389, %v389
        %394 = vrot.lane.b32.xlu0 %v392, 96
        %v395 = vpop.permute.xlu0 %394
        %vm396 = vcmask 64512
        %v398 = vsel %vm396, %v392, 0
        %v401 = vsel %vm396, %v395, 0
        %403 = vmatpush.bf16.xpose.msra.mxu0 0
        %404 = vmatpush.bf16.xpose.msra.mxu0 0
        %405 = vmatpush.bf16.xpose.msra.mxu0 0
        %406 = vmatpush.bf16.xpose.msra.mxu0 0
        %407 = vmatpush.bf16.xpose.msra.mxu0 0
        %408 = vmatpush.bf16.xpose.msra.mxu0 0
        %409 = vmatpush.bf16.xpose.msra.mxu0 0
        %410 = vmatpush.bf16.xpose.msra.mxu0 %v401
        %411 = vmatmul.bf16.gmra.mxu0 %v398
        %v412 = vpop.f32.mrf.mxu0
        %v413 = vadd.f32 0.0, %v412
        %v414 = vpop.f32.mrf.mxu0
        %415 = vdwg.mxu0
        %v416 = vmul.f32 %v413, 0.35355338
        %v417 = vsel %vm396, %v416, -inf
        %418 = vmax.xlane.f32.xlu0 %v417
        %v419 = vpop.xlane.xlu0 %418
        %v420 = vsub.f32 %v416, %v419
        %v421 = vmul.f32 %v420, 1.442695
        %v422 = vpow.pop %v421
        %v423 = vsel %vm396, %v422, 0.0
        %424 = vadd.xlane.f32.xlu0 %v423
        %v425 = vpop.xlane.xlu0 %424
        %v426 = vrcp.pop %v425
        %v427 = vmul.f32 %v422, %v426
        %v428 = vpack.c.bf16 %v427, %v427
        %429 = vrot.lane.b32.xlu0 %v392, 64
        %v430 = vpop.permute.xlu0 %429
        %v432 = vsel %vm396, %v428, 0
        %vm434 = vcmask 1043456
        %v436 = vsel %vm434, %v430, 0
        %438 = vmatpush.bf16.msra.mxu0 0
        %439 = vmatpush.bf16.msra.mxu0 0
        %440 = vmatpush.bf16.msra.mxu0 0
        %441 = vmatpush.bf16.msra.mxu0 0
        %442 = vmatpush.bf16.msra.mxu0 0
        %443 = vmatpush.bf16.msra.mxu0 0
        %444 = vmatpush.bf16.msra.mxu0 0
        %445 = vmatpush.bf16.msra.mxu0 %v436
        %446 = vmatmul.bf16.gmra.mxu0 %v432
        %v447 = vpop.f32.mrf.mxu0
        %v448 = vadd.f32 0.0, %v447
        %v449 = vpop.f32.mrf.mxu0
        %450 = vdwg.mxu0
        %451 = vrot.lane.b32.xlu0 %v392, 120
        %v452 = vpop.permute.xlu0 %451
        %453 = vrot.lane.b32.xlu0 %v392, 88
        %v454 = vpop.permute.xlu0 %453
        %v456 = vsel %vm396, %v452, 0
        %v459 = vsel %vm396, %v454, 0
        %461 = vmatpush.bf16.xpose.msra.mxu0 0
        %462 = vmatpush.bf16.xpose.msra.mxu0 0
        %463 = vmatpush.bf16.xpose.msra.mxu0 0
        %464 = vmatpush.bf16.xpose.msra.mxu0 0
        %465 = vmatpush.bf16.xpose.msra.mxu0 0
        %466 = vmatpush.bf16.xpose.msra.mxu0 0
        %467 = vmatpush.bf16.xpose.msra.mxu0 0
        %468 = vmatpush.bf16.xpose.msra.mxu0 %v459
        %469 = vmatmul.bf16.gmra.mxu0 %v456
        %v470 = vpop.f32.mrf.mxu0
        %v471 = vadd.f32 0.0, %v470
        %v472 = vpop.f32.mrf.mxu0
        %473 = vdwg.mxu0
        %v474 = vmul.f32 %v471, 0.35355338
        %v475 = vsel %vm396, %v474, -inf
        %476 = vmax.xlane.f32.xlu0 %v475
        %v477 = vpop.xlane.xlu0 %476
        %v478 = vsub.f32 %v474, %v477
        %v479 = vmul.f32 %v478, 1.442695
        %v480 = vpow.pop %v479
        %v481 = vsel %vm396, %v480, 0.0
        %482 = vadd.xlane.f32.xlu0 %v481
        %v483 = vpop.xlane.xlu0 %482
        %v484 = vrcp.pop %v483
        %v485 = vmul.f32 %v480, %v484
        %v486 = vpack.c.bf16 %v485, %v485
        %487 = vrot.lane.b32.xlu0 %v392, 56
        %v488 = vpop.permute.xlu0 %487
        %v490 = vsel %vm396, %v486, 0
        %v493 = vsel %vm434, %v488, 0
        %495 = vmatpush.bf16.msra.mxu0 0
        %496 = vmatpush.bf16.msra.mxu0 0
        %497 = vmatpush.bf16.msra.mxu0 0
        %498 = vmatpush.bf16.msra.mxu0 0
        %499 = vmatpush.bf16.msra.mxu0 0
        %500 = vmatpush.bf16.msra.mxu0 0
        %501 = vmatpush.bf16.msra.mxu0 0
        %502 = vmatpush.bf16.msra.mxu0 %v493
        %503 = vmatmul.bf16.gmra.mxu0 %v490
        %v504 = vpop.f32.mrf.mxu0
        %v505 = vadd.f32 0.0, %v504
        %v506 = vpop.f32.mrf.mxu0
        %507 = vdwg.mxu0
        %508 = vrot.lane.b32.xlu0 %v392, 112
        %v509 = vpop.permute.xlu0 %508
        %510 = vrot.lane.b32.xlu0 %v392, 80
        %v511 = vpop.permute.xlu0 %510
        %v513 = vsel %vm396, %v509, 0
        %v516 = vsel %vm396, %v511, 0
        %518 = vmatpush.bf16.xpose.msra.mxu0 0
        %519 = vmatpush.bf16.xpose.msra.mxu0 0
        %520 = vmatpush.bf16.xpose.msra.mxu0 0
        %521 = vmatpush.bf16.xpose.msra.mxu0 0
        %522 = vmatpush.bf16.xpose.msra.mxu0 0
        %523 = vmatpush.bf16.xpose.msra.mxu0 0
        %524 = vmatpush.bf16.xpose.msra.mxu0 0
        %525 = vmatpush.bf16.xpose.msra.mxu0 %v516
        %526 = vmatmul.bf16.gmra.mxu0 %v513
        %v527 = vpop.f32.mrf.mxu0
        %v528 = vadd.f32 0.0, %v527
        %v529 = vpop.f32.mrf.mxu0
        %530 = vdwg.mxu0
        %v531 = vmul.f32 %v528, 0.35355338
        %v532 = vsel %vm396, %v531, -inf
        %533 = vmax.xlane.f32.xlu0 %v532
        %v534 = vpop.xlane.xlu0 %533
        %v535 = vsub.f32 %v531, %v534
        %v536 = vmul.f32 %v535, 1.442695
        %v537 = vpow.pop %v536
        %v538 = vsel %vm396, %v537, 0.0
        %539 = vadd.xlane.f32.xlu0 %v538
        %v540 = vpop.xlane.xlu0 %539
        %v541 = vrcp.pop %v540
        %v542 = vmul.f32 %v537, %v541
        %v543 = vpack.c.bf16 %v542, %v542
        %544 = vrot.lane.b32.xlu0 %v392, 48
        %v545 = vpop.permute.xlu0 %544
        %v547 = vsel %vm396, %v543, 0
        %v550 = vsel %vm434, %v545, 0
        %552 = vmatpush.bf16.msra.mxu0 0
        %553 = vmatpush.bf16.msra.mxu0 0
        %554 = vmatpush.bf16.msra.mxu0 0
        %555 = vmatpush.bf16.msra.mxu0 0
        %556 = vmatpush.bf16.msra.mxu0 0
        %557 = vmatpush.bf16.msra.mxu0 0
        %558 = vmatpush.bf16.msra.mxu0 0
        %559 = vmatpush.bf16.msra.mxu0 %v550
        %560 = vmatmul.bf16.gmra.mxu0 %v547
        %v561 = vpop.f32.mrf.mxu0
        %v562 = vadd.f32 0.0, %v561
        %v563 = vpop.f32.mrf.mxu0
        %564 = vdwg.mxu0
        %565 = vrot.lane.b32.xlu0 %v392, 104
        %v566 = vpop.permute.xlu0 %565
        %567 = vrot.lane.b32.xlu0 %v392, 72
        %v568 = vpop.permute.xlu0 %567
        %v570 = vsel %vm396, %v566, 0
        %v573 = vsel %vm396, %v568, 0
        %575 = vmatpush.bf16.xpose.msra.mxu0 0
        %576 = vmatpush.bf16.xpose.msra.mxu0 0
        %577 = vmatpush.bf16.xpose.msra.mxu0 0
        %578 = vmatpush.bf16.xpose.msra.mxu0 0
        %579 = vmatpush.bf16.xpose.msra.mxu0 0
        %580 = vmatpush.bf16.xpose.msra.mxu0 0
        %581 = vmatpush.bf16.xpose.msra.mxu0 0
        %582 = vmatpush.bf16.xpose.msra.mxu0 %v573
        %583 = vmatmul.bf16.gmra.mxu0 %v570
        %v584 = vpop.f32.mrf.mxu0
        %v585 = vadd.f32 0.0, %v584
        %v586 = vpop.f32.mrf.mxu0
        %587 = vdwg.mxu0
        %v588 = vmul.f32 %v585, 0.35355338
        %v589 = vsel %vm396, %v588, -inf
        %590 = vmax.xlane.f32.xlu0 %v589
        %v591 = vpop.xlane.xlu0 %590
        %v592 = vsub.f32 %v588, %v591
        %v593 = vmul.f32 %v592, 1.442695
        %v594 = vpow.pop %v593
        %v595 = vsel %vm396, %v594, 0.0
        %596 = vadd.xlane.f32.xlu0 %v595
        %v597 = vpop.xlane.xlu0 %596
        %v598 = vrcp.pop %v597
        %v599 = vmul.f32 %v594, %v598
        %v600 = vpack.c.bf16 %v599, %v599
        %601 = vrot.lane.b32.xlu0 %v392, 40
        %v602 = vpop.permute.xlu0 %601
        %v604 = vsel %vm396, %v600, 0
        %v607 = vsel %vm434, %v602, 0
        %609 = vmatpush.bf16.msra.mxu0 0
        %610 = vmatpush.bf16.msra.mxu0 0
        %611 = vmatpush.bf16.msra.mxu0 0
        %612 = vmatpush.bf16.msra.mxu0 0
        %613 = vmatpush.bf16.msra.mxu0 0
        %614 = vmatpush.bf16.msra.mxu0 0
        %615 = vmatpush.bf16.msra.mxu0 0
        %616 = vmatpush.bf16.msra.mxu0 %v607
        %617 = vmatmul.bf16.gmra.mxu0 %v604
        %v618 = vpop.f32.mrf.mxu0
        %v619 = vadd.f32 0.0, %v618
        %v620 = vpop.f32.mrf.mxu0
        %621 = vdwg.mxu0
        %623 = vrot.lane.b32.xlu0 %v505, 8
        %v624 = vpop.permute.xlu0 %623
        %627 = vrot.lane.b32.xlu0 %v562, 16
        %v628 = vpop.permute.xlu0 %627
        %631 = vrot.lane.b32.xlu0 %v619, 24
        %v632 = vpop.permute.xlu0 %631
        %v634 = vsel %vm396, %v448, %v624
        %vm635 = vcmask 130048
        %v636 = vsel %vm635, %v634, %v628
        %vm637 = vcmask 195584
        %v638 = vsel %vm637, %v636, %v632
        %v639 = vpack.c.bf16 %v638, %v638
        %v640 = vld [vmem:[#allocation8] sm:$0xf]
        %v641 = vld [vmem:[#allocation8 + $0x4] sm:$0xf]
        %v642 = vld [vmem:[#allocation8 + $0x8] sm:$0xf]
        %v643 = vld [vmem:[#allocation8 + $0xc] sm:$0xf]
        %v644 = vld [vmem:[%s5] sm:$0x1]
        %v646 = vperm.slane %v644, 0
        %v652 = vunpack.c.l.b16 %v640
        %v653 = vunpack.c.l.b16 %v641
        %v654 = vunpack.c.l.b16 %v642
        %v655 = vunpack.c.l.b16 %v643
        %v656 = vpack.c.b16 %v653, %v652
        %v657 = vpack.c.b16 %v655, %v654
        %v661 = vsel %vm321, %v639, 0
        %663 = vmatpush.bf16.msra.mxu0 0
        %664 = vmatpush.bf16.msra.mxu0 0
        %665 = vmatpush.bf16.msra.mxu0 0
        %666 = vmatpush.bf16.msra.mxu0 0
        %667 = vmatpush.bf16.msra.mxu0 0
        %668 = vmatpush.bf16.msra.mxu0 0
        %669 = vmatpush.bf16.msra.mxu0 %v657
        %670 = vmatpush.bf16.msra.mxu0 %v656
        %671 = vmatmul.bf16.gmra.mxu0 %v661
        %v672 = vpop.f32.mrf.mxu0
        %v673 = vadd.f32 %v646, %v672
        %v674 = vpop.f32.mrf.mxu0
        %675 = vdwg.mxu0
        %v676 = vadd.f32 %v318, %v673
        %677 = vst.msk [vmem:[%s316] sm:$0xff] %vm321, %v676
        %s678 = sand.u32 %s164, 1
        %s679 = scalar_lea.sflag [#allocation4], %s678
        %s680 = sand.u32 %s164, 1
        %s681 = smul.addr %s680, 8
        %s682 = scalar_lea.vmem [#allocation10], %s681
        // Predicated region
        $region61: #{tpu_custom_call.1} parent=43 // pred_check
          %p683 = pneg %p174
        $region62: #{tpu_custom_call.1} parent=43 // pred_check_branch
          %685 = sbr.rel (%p683) target = $region64
        $region63: #{tpu_custom_call.1} parent=43 // pred_region
          %687 = vsyncadd %s679, 0
          %s688 = smul.addr %s25, 8
          %s689 = scalar_lea.hbm %s6, %s688
          %s691 = sshll.u32 %s682, 4
          %s692 = int_to_ptr.vmem [resolvable:$true] %s691
          %s693 = sshll.u32 %s689, 4
          %s694 = int_to_ptr.hbm [resolvable:$true] %s693
          %696 = dma.vmem_to_hbm [thread:$0]  %s692, 128, %s694, %s679
        $region64: #{tpu_custom_call.1} parent=43 // pred_fallthru
          _
      $region44: #{tpu_custom_call.1} parent=5 // pred_fallthru
        _
      %p697 = scmp.le.s32.totalorder 2, %s20
      // Predicated region
      $region65: #{tpu_custom_call.1} parent=5 // pred_check
        %p698 = pneg %p697
      $region66: #{tpu_custom_call.1} parent=5 // pred_check_branch
        %700 = sbr.rel (%p698) target = $region68
      $region67: #{tpu_custom_call.1} parent=5 // pred_region
        %s701 = ssub.s32 %s20, 2
        // Predicated region
        $region69: #{tpu_custom_call.1} parent=67 // pred_check
          %p702 = pneg %p180
        $region70: #{tpu_custom_call.1} parent=67 // pred_check_branch
          %704 = sbr.rel (%p702) target = $region72
        $region71: #{tpu_custom_call.1} parent=67 // pred_region
          %s705 = sand.u32 %s165, 1
          %s706 = scalar_lea.sflag [#allocation4], %s705
          %s707 = sand.u32 %s165, 1
          %s708 = smul.addr %s707, 8
          %s709 = scalar_lea.vmem [#allocation10], %s708
          %711 = dma.done %s706, 128
        $region72: #{tpu_custom_call.1} parent=67 // pred_fallthru
          _
      $region68: #{tpu_custom_call.1} parent=5 // pred_fallthru
        _
    $region6: #{tpu_custom_call.1} parent=1 // loop_footer
      %s24 = sadd.s32 1, %s20
    $region7: #{tpu_custom_call.1} parent=1 // loop_footer_branch
      %19 = sbr.rel target = $region3
    $region8: #{tpu_custom_call.1} parent=1 // loop_exit
      _
    %712 = vsyncpa [#allocation3], 1
    %s713 = scalar_lea.sflag [#allocation3], 1
    %714 = vsyncpa %s713, 1
    %715 = vsyncpa [#allocation6], 1
    %716 = vsyncpa [#allocation9], 1
    %717 = vsyncpa [#allocation4], 1
    %s718 = scalar_lea.sflag [#allocation4], 1
    %719 = vsyncpa %s718, 1

</llo_original>
